<compile_context>
chip_gen: v7x
topology: tpu7x:2x2x1
jax: 0.10.0
libtpu: 0.0.40
codegen_flags: <defaults>
</compile_context>

<pallas_src>
import functools

import jax
import jax.numpy as jnp
from jax import lax
from jax.experimental import pallas as pl
from jax.experimental.pallas import tpu as pltpu


def _round_up(x, m):
    return (x + m - 1) // m * m


def _hash32(x):
    # lowbias32: good-avalanche 32-bit integer mix; pure VPU ops (xor/shift/mul).
    x = x ^ (x >> 16)
    x = x * jnp.uint32(0x7FEB352D)
    x = x ^ (x >> 15)
    x = x * jnp.uint32(0x846CA68B)
    x = x ^ (x >> 16)
    return x


def _embed_tanh_dropout_kernel(seed_ref, ids_ref, emb_ref, out_ref, *, use_one_hot):
    """One grid step == one tile of TOK tokens.

    seed_ref: SMEM (1,)      int32 -- base dropout seed (scalar-prefetched)
    ids_ref:  VMEM (TOK, 1)  int32 -- token ids for this tile
    emb_ref:  VMEM (V, Dp)         -- full embedding table (resident across the grid)
    out_ref:  VMEM (TOK, Dp)       -- dense output tile (sublane/lane aligned)
    """
    tile = pl.program_id(0)
    tok, d = out_ref.shape
    v = emb_ref.shape[0]

    if use_one_hot:
        # Row gather as a one-hot MXU matmul: exact for a 0/1 LHS, and it runs in
        # the vmatmul slot instead of TOK serialized dynamic slices on scalar/XLU.
        one_hot = (ids_ref[...] ==
                   lax.broadcasted_iota(jnp.int32, (tok, v), 1)).astype(emb_ref.dtype)
        rows = jnp.dot(one_hot, emb_ref[...], preferred_element_type=jnp.float32)
    else:
        # Larger (still VMEM-resident) vocab: fall back to an in-kernel gather.
        rows = jnp.take(emb_ref[...], ids_ref[...].reshape(-1), axis=0)
        rows = rows.astype(jnp.float32)

    h = jnp.tanh(rows)                                             # F.tanh (EUP)

    # Dropout(p=0.5), training semantics: stateless per-element hash keyed on the
    # global flat element index; one vectorized draw per tile; integer keep test.
    row_ix = lax.broadcasted_iota(jnp.int32, (tok, d), 0).astype(jnp.uint32)
    col_ix = lax.broadcasted_iota(jnp.int32, (tok, d), 1).astype(jnp.uint32)
    base_row = (tile * tok).astype(jnp.uint32)
    flat_ix = (base_row + row_ix) * jnp.uint32(d) + col_ix
    seeded = flat_ix + seed_ref[0].astype(jnp.uint32) * jnp.uint32(0x9E3779B9)
    bits = _hash32(seeded)
    keep = bits < jnp.uint32(0x80000000)                           # P(keep) = 0.5

    out_ref[...] = jnp.where(keep, h * jnp.float32(2.0),
                             jnp.float32(0.0)).astype(out_ref.dtype)


def word_embedding2_forward(word_id, emb_table, *, seed=0, block_tokens=1024,
                            out_dtype=jnp.float32):
    """Pallas implementation of WordEmbedding2.forward (training mode).

    Set out_dtype=jnp.bfloat16 to halve the dominant HBM write traffic when the
    consumer tolerates it (default float32 matches the PyTorch module).
    """
    B, S = word_id.shape
    V, D = emb_table.shape
    tbl_itemsize = jnp.dtype(emb_table.dtype).itemsize
    out_itemsize = jnp.dtype(out_dtype).itemsize

    # Lane-dense output: pad D up to a multiple of 128 so stores are unmasked vst.
    D_pad = _round_up(D, 128)
    table = emb_table if D_pad == D else jnp.pad(emb_table, ((0, 0), (0, D_pad - D)))

    # Keep ids 2-D (N, 1): the (8,128) constraint then never bites the ids BlockSpec,
    # whatever token-tile size is chosen.
    ids = word_id.reshape(-1, 1).astype(jnp.int32)
    N = ids.shape[0]

    # One-hot MXU gather for small/medium vocabularies; in-kernel take otherwise.
    use_one_hot = V <= 2048

    # Generation-aware VMEM budget (v7x: 64 MiB/TC; v5e/v6e: 128 MiB).  Note that on
    # v7x with dimension_semantics=("parallel",) each TensorCore holds its own copy
    # of the resident table, so the per-TC capacity is what gates this path.
    try:
        vmem_cap = int(pltpu.get_tpu_info().vmem_capacity_bytes)
    except Exception:                       # query unavailable -> be conservative
        vmem_cap = 64 << 20
    budget = vmem_cap - (8 << 20)           # headroom

    table_bytes = V * D_pad * tbl_itemsize

    def _vmem_needed(tok):
        out_tile = 2 * tok * D_pad * out_itemsize                  # double-buffered out
        ids_tile = 2 * tok * 4                                     # double-buffered ids
        one_hot = tok * V * tbl_itemsize if use_one_hot else 0     # in-kernel temporary
        # Table counted x2: covers the double-buffered fallback path; with the
        # requested pl.Buffered(1) single-buffering the real footprint is half this.
        return 2 * table_bytes + out_tile + ids_tile + one_hot + (4 << 20)

    # Token tile: multiple of 8 sublanes, as large as the VMEM budget allows.
    tok = max(8, min(_round_up(block_tokens, 8), _round_up(N, 8)))
    while _vmem_needed(tok) > budget and tok > 8:
        tok = max(8, (tok // 16) * 8)                              # halve, keep 8-aligned
    if _vmem_needed(tok) > budget:
        # TODO(synk): for vocabularies too large for VMEM residency, switch to a
        # manual batched row-DMA gather (memory_space=pl.ANY table + make_async_copy
        # into a double-buffered VMEM scratch, prefetching tile i+1 behind tile i).
        raise NotImplementedError(
            f"embedding table ({table_bytes / 2**20:.1f} MiB) too large for the "
            f"VMEM-resident path on this chip ({vmem_cap / 2**20:.0f} MiB VMEM)")

    n_pad = _round_up(N, tok)
    if n_pad != N:
        ids = jnp.pad(ids, ((0, n_pad - N), (0, 0)))               # pad with valid row 0
    num_tiles = n_pad // tok

    vmem_limit = int(min(max(_vmem_needed(tok), 16 << 20), vmem_cap - (4 << 20)))
    seed_arr = jnp.asarray([seed], dtype=jnp.int32)
    kernel = functools.partial(_embed_tanh_dropout_kernel, use_one_hot=use_one_hot)

    def _run(single_buffer_table):
        if single_buffer_table:
            # Constant block index across the grid -> the table is DMA'd once; request
            # a single VMEM buffer so it does not cost 2x table_bytes (matters most on
            # v7x with 64 MiB VMEM per TensorCore).
            table_spec = pl.BlockSpec((V, D_pad), lambda i, seed: (0, 0),
                                      pipeline_mode=pl.Buffered(1))
        else:
            table_spec = pl.BlockSpec((V, D_pad), lambda i, seed: (0, 0))
        return pl.pallas_call(
            kernel,
            out_shape=jax.ShapeDtypeStruct((n_pad, D_pad), out_dtype),
            grid_spec=pltpu.PrefetchScalarGridSpec(
                num_scalar_prefetch=1,                             # seed -> SMEM
                grid=(num_tiles,),
                in_specs=[
                    pl.BlockSpec((tok, 1), lambda i, seed: (i, 0)),    # ids tile
                    table_spec,                                        # resident table
                ],
                out_specs=pl.BlockSpec((tok, D_pad), lambda i, seed: (i, 0)),
            ),
            compiler_params=pltpu.CompilerParams(
                dimension_semantics=("parallel",),                 # tokens independent
                vmem_limit_bytes=vmem_limit,
            ),
        )(seed_arr, ids, table)

    try:
        out_flat = _run(single_buffer_table=True)
    except Exception:
        # pipeline_mode / Buffered(1) unsupported in this jax version: fall back to
        # default double buffering (already covered by the conservative VMEM budget).
        out_flat = _run(single_buffer_table=False)

    return out_flat[:N, :D].reshape(B, S, D)


if __name__ == "__main__":
    # Small, deterministic setup consistent with the module's __init__.
    vocab_size = 32
    embedding_dim = 128      # lane-aligned embedding dim
    batch, seq = 2, 8

    key = jax.random.PRNGKey(0)
    k_w, k_ids = jax.random.split(key)

    # nn.Embedding default init: weight ~ N(0, 1)
    emb_table = jax.random.normal(k_w, (vocab_size, embedding_dim), dtype=jnp.float32)
    word_id = jax.random.randint(k_ids, (batch, seq), 0, vocab_size, dtype=jnp.int32)

    out = word_embedding2_forward(word_id, emb_table, seed=0)
    out = jax.block_until_ready(out)

    assert out.shape == (batch, seq, embedding_dim)

    # Every surviving (non-dropped) element must equal 2 * tanh(embedding row).
    ref = 2.0 * jnp.tanh(emb_table[word_id.reshape(-1)]).reshape(batch, seq, embedding_dim)
    mask = out != 0.0
    assert bool(jnp.allclose(jnp.where(mask, out, ref), ref, atol=1e-5, rtol=1e-5))

    # Dropout should zero roughly half the elements.
    drop_frac = float(jnp.mean((out == 0.0).astype(jnp.float32)))
    assert 0.35 < drop_frac < 0.65, f"unexpected dropout fraction {drop_frac}"

    print("KERNEL_OK")
</pallas_src>

<mosaic_0001>
module attributes {stable_mosaic.version = 11 : i64} {
  func.func @_embed_tanh_dropout_kernel(%arg0: i32, %arg1: memref<1xi32, #tpu.memory_space<smem>>, %arg2: memref<16x1xi32, #tpu.memory_space<vmem>>, %arg3: memref<32x128xf32, #tpu.memory_space<vmem>>, %arg4: memref<16x128xf32, #tpu.memory_space<vmem>>) attributes {dimension_semantics = [#tpu.dimension_semantics<parallel>], iteration_bounds = array<i64: 1>, scalar_prefetch = 1 : i64, scratch_operands = 0 : i64, tpu.core_type = #tpu.core_type<tc>, window_params = [{transform_indices = @transform_0, window_bounds = array<i64: 16, 1>}, {pipeline_mode = #tpu.pipeline_mode<synchronous>, transform_indices = @transform_1, window_bounds = array<i64: 32, 128>}, {transform_indices = @transform_2, window_bounds = array<i64: 16, 128>}]} {
    %c0 = arith.constant 0 : index
    %c0_0 = arith.constant 0 : index
    %0 = vector.load %arg2[%c0, %c0_0] : memref<16x1xi32, #tpu.memory_space<vmem>>, vector<16x1xi32>
    %1 = tpu.iota {dimensions = array<i32: 1>} : vector<16x32xi32>
    %2 = vector.broadcast %0 : vector<16x1xi32> to vector<16x32xi32>
    %3 = arith.cmpi eq, %2, %1 : vector<16x32xi32>
    %4 = arith.extui %3 : vector<16x32xi1> to vector<16x32xi32>
    %5 = arith.sitofp %4 : vector<16x32xi32> to vector<16x32xf32>
    %c0_1 = arith.constant 0 : index
    %c0_2 = arith.constant 0 : index
    %6 = vector.load %arg3[%c0_1, %c0_2] : memref<32x128xf32, #tpu.memory_space<vmem>>, vector<32x128xf32>
    %cst = arith.constant dense<0.000000e+00> : vector<16x128xf32>
    %7 = tpu.matmul %5, %6, %cst {dimension_numbers = #tpu.dot_dimension_numbers<[1], [0], [0], [1], [0, 0, 1, 1], [], []>} : vector<16x32xf32>, vector<32x128xf32>, vector<16x128xf32> -> vector<16x128xf32>
    %8 = math.tanh %7 : vector<16x128xf32>
    %9 = tpu.iota {dimensions = array<i32: 0>} : vector<16x128xi32>
    %10 = tpu.iota {dimensions = array<i32: 1>} : vector<16x128xi32>
    %c16_i32 = arith.constant 16 : i32
    %11 = arith.muli %arg0, %c16_i32 : i32
    %12 = vector.broadcast %11 : i32 to vector<16x128xi32>
    %13 = arith.addi %12, %9 : vector<16x128xi32>
    %c128_i32 = arith.constant 128 : i32
    %14 = vector.broadcast %c128_i32 : i32 to vector<16x128xi32>
    %15 = arith.muli %13, %14 : vector<16x128xi32>
    %16 = arith.addi %15, %10 : vector<16x128xi32>
    %c0_3 = arith.constant 0 : index
    %17 = memref.load %arg1[%c0_3] : memref<1xi32, #tpu.memory_space<smem>>
    %c-1640531527_i32 = arith.constant -1640531527 : i32
    %18 = arith.muli %17, %c-1640531527_i32 : i32
    %19 = vector.broadcast %18 : i32 to vector<16x128xi32>
    %20 = arith.addi %16, %19 : vector<16x128xi32>
    %c16_i32_4 = arith.constant 16 : i32
    %21 = vector.broadcast %c16_i32_4 : i32 to vector<16x128xi32>
    %22 = arith.shrui %20, %21 : vector<16x128xi32>
    %23 = arith.xori %20, %22 : vector<16x128xi32>
    %c2146121005_i32 = arith.constant 2146121005 : i32
    %24 = vector.broadcast %c2146121005_i32 : i32 to vector<16x128xi32>
    %25 = arith.muli %23, %24 : vector<16x128xi32>
    %c15_i32 = arith.constant 15 : i32
    %26 = vector.broadcast %c15_i32 : i32 to vector<16x128xi32>
    %27 = arith.shrui %25, %26 : vector<16x128xi32>
    %28 = arith.xori %25, %27 : vector<16x128xi32>
    %c-2073254261_i32 = arith.constant -2073254261 : i32
    %29 = vector.broadcast %c-2073254261_i32 : i32 to vector<16x128xi32>
    %30 = arith.muli %28, %29 : vector<16x128xi32>
    %c16_i32_5 = arith.constant 16 : i32
    %31 = vector.broadcast %c16_i32_5 : i32 to vector<16x128xi32>
    %32 = arith.shrui %30, %31 : vector<16x128xi32>
    %33 = arith.xori %30, %32 : vector<16x128xi32>
    %c-2147483648_i32 = arith.constant -2147483648 : i32
    %34 = vector.broadcast %c-2147483648_i32 : i32 to vector<16x128xi32>
    %35 = arith.cmpi ult, %33, %34 : vector<16x128xi32>
    %cst_6 = arith.constant 2.000000e+00 : f32
    %36 = vector.broadcast %cst_6 : f32 to vector<16x128xf32>
    %37 = arith.mulf %8, %36 : vector<16x128xf32>
    %cst_7 = arith.constant 0.000000e+00 : f32
    %38 = vector.broadcast %cst_7 : f32 to vector<16x128xf32>
    %39 = arith.select %35, %37, %38 : vector<16x128xi1>, vector<16x128xf32>
    %c0_8 = arith.constant 0 : index
    %c0_9 = arith.constant 0 : index
    %40 = vector.load %arg4[%c0_8, %c0_9] : memref<16x128xf32, #tpu.memory_space<vmem>>, vector<16x128xf32>
    tpu.vector_store %arg4[%c0_8, %c0_9], %39 {strides = array<i32>} : memref<16x128xf32, #tpu.memory_space<vmem>>, vector<16x128xf32>,
    return
  }
  func.func @transform_0(%arg0: i32, %arg1: memref<1xi32, #tpu.memory_space<smem>>) -> (i32, i32) {
    %c0_i32 = arith.constant 0 : i32
    %c0_i32_0 = arith.constant 0 : i32
    return %arg0, %c0_i32 : i32, i32
  }
  func.func @transform_1(%arg0: i32, %arg1: memref<1xi32, #tpu.memory_space<smem>>) -> (i32, i32) {
    %c0_i32 = arith.constant 0 : i32
    %c0_i32_0 = arith.constant 0 : i32
    %c0_i32_1 = arith.constant 0 : i32
    return %c0_i32, %c0_i32_0 : i32, i32
  }
  func.func @transform_2(%arg0: i32, %arg1: memref<1xi32, #tpu.memory_space<smem>>) -> (i32, i32) {
    %c0_i32 = arith.constant 0 : i32
    %c0_i32_0 = arith.constant 0 : i32
    return %arg0, %c0_i32 : i32, i32
  }
}

module attributes {stable_mosaic.version = 11 : i64} {
  func.func @_embed_tanh_dropout_kernel(%arg0: i32, %arg1: memref<1xi32, #tpu.memory_space<smem>>, %arg2: memref<16x1xi32, #tpu.memory_space<vmem>>, %arg3: memref<32x128xf32, #tpu.memory_space<vmem>>, %arg4: memref<16x128xf32, #tpu.memory_space<vmem>>) attributes {dimension_semantics = [#tpu.dimension_semantics<parallel>], iteration_bounds = array<i64: 1>, scalar_prefetch = 1 : i64, scratch_operands = 0 : i64, tpu.core_type = #tpu.core_type<tc>, window_params = [{transform_indices = @transform_0, window_bounds = array<i64: 16, 1>}, {pipeline_mode = #tpu.pipeline_mode<synchronous>, transform_indices = @transform_1, window_bounds = array<i64: 32, 128>}, {transform_indices = @transform_2, window_bounds = array<i64: 16, 128>}]} {
    %c0 = arith.constant 0 : index
    %c0_0 = arith.constant 0 : index
    %0 = vector.load %arg2[%c0, %c0_0] : memref<16x1xi32, #tpu.memory_space<vmem>>, vector<16x1xi32>
    %1 = tpu.iota {dimensions = array<i32: 1>} : vector<16x32xi32>
    %2 = vector.broadcast %0 : vector<16x1xi32> to vector<16x32xi32>
    %3 = arith.cmpi eq, %2, %1 : vector<16x32xi32>
    %4 = arith.extui %3 : vector<16x32xi1> to vector<16x32xi32>
    %5 = arith.sitofp %4 : vector<16x32xi32> to vector<16x32xf32>
    %c0_1 = arith.constant 0 : index
    %c0_2 = arith.constant 0 : index
    %6 = vector.load %arg3[%c0_1, %c0_2] : memref<32x128xf32, #tpu.memory_space<vmem>>, vector<32x128xf32>
    %cst = arith.constant dense<0.000000e+00> : vector<16x128xf32>
    %7 = tpu.matmul %5, %6, %cst {dimension_numbers = #tpu.dot_dimension_numbers<[1], [0], [0], [1], [0, 0, 1, 1], [], []>} : vector<16x32xf32>, vector<32x128xf32>, vector<16x128xf32> -> vector<16x128xf32>
    %8 = math.tanh %7 : vector<16x128xf32>
    %9 = tpu.iota {dimensions = array<i32: 0>} : vector<16x128xi32>
    %10 = tpu.iota {dimensions = array<i32: 1>} : vector<16x128xi32>
    %c16_i32 = arith.constant 16 : i32
    %11 = arith.muli %arg0, %c16_i32 : i32
    %12 = vector.broadcast %11 : i32 to vector<16x128xi32>
    %13 = arith.addi %12, %9 : vector<16x128xi32>
    %c128_i32 = arith.constant 128 : i32
    %14 = vector.broadcast %c128_i32 : i32 to vector<16x128xi32>
    %15 = arith.muli %13, %14 : vector<16x128xi32>
    %16 = arith.addi %15, %10 : vector<16x128xi32>
    %c0_3 = arith.constant 0 : index
    %17 = memref.load %arg1[%c0_3] : memref<1xi32, #tpu.memory_space<smem>>
    %c-1640531527_i32 = arith.constant -1640531527 : i32
    %18 = arith.muli %17, %c-1640531527_i32 : i32
    %19 = vector.broadcast %18 : i32 to vector<16x128xi32>
    %20 = arith.addi %16, %19 : vector<16x128xi32>
    %c16_i32_4 = arith.constant 16 : i32
    %21 = vector.broadcast %c16_i32_4 : i32 to vector<16x128xi32>
    %22 = arith.shrui %20, %21 : vector<16x128xi32>
    %23 = arith.xori %20, %22 : vector<16x128xi32>
    %c2146121005_i32 = arith.constant 2146121005 : i32
    %24 = vector.broadcast %c2146121005_i32 : i32 to vector<16x128xi32>
    %25 = arith.muli %23, %24 : vector<16x128xi32>
    %c15_i32 = arith.constant 15 : i32
    %26 = vector.broadcast %c15_i32 : i32 to vector<16x128xi32>
    %27 = arith.shrui %25, %26 : vector<16x128xi32>
    %28 = arith.xori %25, %27 : vector<16x128xi32>
    %c-2073254261_i32 = arith.constant -2073254261 : i32
    %29 = vector.broadcast %c-2073254261_i32 : i32 to vector<16x128xi32>
    %30 = arith.muli %28, %29 : vector<16x128xi32>
    %c16_i32_5 = arith.constant 16 : i32
    %31 = vector.broadcast %c16_i32_5 : i32 to vector<16x128xi32>
    %32 = arith.shrui %30, %31 : vector<16x128xi32>
    %33 = arith.xori %30, %32 : vector<16x128xi32>
    %c-2147483648_i32 = arith.constant -2147483648 : i32
    %34 = vector.broadcast %c-2147483648_i32 : i32 to vector<16x128xi32>
    %35 = arith.cmpi ult, %33, %34 : vector<16x128xi32>
    %cst_6 = arith.constant 2.000000e+00 : f32
    %36 = vector.broadcast %cst_6 : f32 to vector<16x128xf32>
    %37 = arith.mulf %8, %36 : vector<16x128xf32>
    %cst_7 = arith.constant 0.000000e+00 : f32
    %38 = vector.broadcast %cst_7 : f32 to vector<16x128xf32>
    %39 = arith.select %35, %37, %38 : vector<16x128xi1>, vector<16x128xf32>
    %c0_8 = arith.constant 0 : index
    %c0_9 = arith.constant 0 : index
    %40 = vector.load %arg4[%c0_8, %c0_9] : memref<16x128xf32, #tpu.memory_space<vmem>>, vector<16x128xf32>
    tpu.vector_store %arg4[%c0_8, %c0_9], %39 {strides = array<i32>} : memref<16x128xf32, #tpu.memory_space<vmem>>, vector<16x128xf32>,
    return
  }
  func.func @transform_0(%arg0: i32, %arg1: memref<1xi32, #tpu.memory_space<smem>>) -> (i32, i32) {
    %c0_i32 = arith.constant 0 : i32
    %c0_i32_0 = arith.constant 0 : i32
    return %arg0, %c0_i32 : i32, i32
  }
  func.func @transform_1(%arg0: i32, %arg1: memref<1xi32, #tpu.memory_space<smem>>) -> (i32, i32) {
    %c0_i32 = arith.constant 0 : i32
    %c0_i32_0 = arith.constant 0 : i32
    %c0_i32_1 = arith.constant 0 : i32
    return %c0_i32, %c0_i32_0 : i32, i32
  }
  func.func @transform_2(%arg0: i32, %arg1: memref<1xi32, #tpu.memory_space<smem>>) -> (i32, i32) {
    %c0_i32 = arith.constant 0 : i32
    %c0_i32_0 = arith.constant 0 : i32
    return %arg0, %c0_i32 : i32, i32
  }
}

</mosaic_0001>

<llo_original>
// kernel: tpu_custom_call.1
$region0: #{tpu_custom_call.1}
  #allocation0 [shape = 'u32[]', space=smem, size = 0x4, offset = 0x4, fixed_abs, tag = 'smem constant byte address 0x4 - core index']
  #allocation1 [shape = 'u32[144,128]{1,0:T(1,128)}', space=vmem, size = 0x12000, scoped, tag = 'internal scratch']
  #allocation2 [shape = 's32[1]{0}', space=sflag, size = 0x4, scoped, tag = 'scoped memory for tpu_custom_call.1']
  #allocation3 [shape = 's32[1]{0:T(128)S(6)}', space=smem, size = 0x200, scoped, tag = 'prefetched SMEM operand 0']
  %s0 = inlined_call_operand.<no memory space> [shape: s32[1], index: 0, kind: input, shape index: {}]
  %s1 = inlined_call_operand.vmem [shape: s32[16,1], index: 1, kind: input, shape index: {}]
  %s2 = inlined_call_operand.hbm [shape: f32[32,128], index: 2, kind: input, shape index: {}]
  %s3 = inlined_call_operand.hbm [shape: f32[16,128], index: 3, kind: output, shape index: {}]
  %s4 = sld [smem:[#allocation0]]
  $region22: #{tpu_custom_call.1} parent=0
    _
  %s6 = ssub.s32 1, %s4
  %s7 = scalar_select 0, %s6, %s4
  %8 = sst [smem:[#allocation3]] %s0
  $region1: #{tpu_custom_call.1} parent=0
    #allocation4 [shape = 'u8[16384]{0}', space=vmem, size = 0x4000, scoped, tag = 'input window, operand 2, single buffered']
    #allocation5 [shape = 's32[1]{0}', space=sflag, size = 0x4, scoped, tag = 'scoped memory for tpu_custom_call.1']
    #allocation6 [shape = 's32[1]{0}', space=sflag, size = 0x4, scoped, tag = 'scoped memory for tpu_custom_call.1']
    #allocation7 [shape = 'u8[8192]{0}', space=vmem, size = 0x2000, scoped, tag = 'output window, operand 0, single buffered']
    %9 = vsyncpa [#allocation5], 0
    %10 = vsyncpa [#allocation6], 0
    // Predicated region
    $region2: #{tpu_custom_call.1} parent=1 // pred_check
      _
    $region3: #{tpu_custom_call.1} parent=1 // pred_check_branch
      %12 = sbr.rel (0) target = $region5
    $region4: #{tpu_custom_call.1} parent=1 // pred_region
      _
    $region5: #{tpu_custom_call.1} parent=1 // pred_fallthru
      _
    // Predicated region
    $region6: #{tpu_custom_call.1} parent=1 // pred_check
      _
    $region7: #{tpu_custom_call.1} parent=1 // pred_check_branch
      %14 = sbr.rel (0) target = $region9
    $region8: #{tpu_custom_call.1} parent=1 // pred_region
      %s16 = ssub.s32 512, 512
      %17 = vsyncadd [#allocation5], %s16
      %s18 = sshll.u32 [#allocation4], 4
      %s19 = int_to_ptr.vmem [resolvable:$true] %s18
      %24 = dma.hbm_to_vmem [thread:$0]  %s2, 512, %s19, [#allocation5], 128, 128, 8
    $region9: #{tpu_custom_call.1} parent=1 // pred_fallthru
      _
    // Predicated region
    $region10: #{tpu_custom_call.1} parent=1 // pred_check
      _
    $region11: #{tpu_custom_call.1} parent=1 // pred_check_branch
      %26 = sbr.rel (0) target = $region13
    $region12: #{tpu_custom_call.1} parent=1 // pred_region
      %27 = dma.done [#allocation5], 512
    $region13: #{tpu_custom_call.1} parent=1 // pred_fallthru
      _
    %v28 = vld [vmem:[%s1] sm:$0xff]
    %v29 = vld [vmem:[%s1 + $0x8] sm:$0xff]
    %v30 = vlaneseq
    %v31 = vand.u32 %v30, 127
    %32 = vset.pattern.permute.xlu0 0
    %33 = vperm.xlu0 %32, %v28
    %v34 = vpop.permute.xlu0 %33
    %35 = vset.pattern.permute.xlu0 0
    %36 = vperm.xlu0 %35, %v29
    %v37 = vpop.permute.xlu0 %36
    %vm38 = vcmp.eq.s32.totalorder %v34, %v31
    %vm39 = vcmp.eq.s32.totalorder %v37, %v31
    %v40 = vsel %vm38, 1, 0
    %v41 = vsel %vm39, 1, 0
    %v42 = vcvt.s32.f32 %v40
    %v43 = vcvt.s32.f32 %v41
    %v44 = vld [vmem:[#allocation4] sm:$0xff]
    %v45 = vld [vmem:[#allocation4 + $0x8] sm:$0xff]
    %v46 = vld [vmem:[#allocation4 + $0x10] sm:$0xff]
    %v47 = vld [vmem:[#allocation4 + $0x18] sm:$0xff]
    %vm48 = vcmask 261120
    %v50 = vsel %vm48, %v42, 0
    %v53 = vsel %vm48, %v43, 0
    %55 = vmatprep.subr.mxu0 0.0
    %56 = vmatpush1.msra.mxu0 %v44
    %57 = vmatprep.subr.mxu0 0.0
    %58 = vmatpush1.msra.mxu0 %v45
    %59 = vmatprep.subr.mxu0 0.0
    %60 = vmatpush1.msra.mxu0 %v46
    %61 = vmatprep.subr.mxu0 0.0
    %62 = vmatpush1.msra.mxu0 %v47
    %63 = vmatprep.subr.mxu0 0.0
    %64 = vmatpush1.msra.mxu0 0.0
    %65 = vmatprep.subr.mxu0 0.0
    %66 = vmatpush1.msra.mxu0 0.0
    %67 = vmatprep.subr.mxu0 0.0
    %68 = vmatpush1.msra.mxu0 0.0
    %69 = vmatprep.subr.mxu0 0.0
    %70 = vmatpush1.msra.mxu0 0.0
    %71 = vmatprep.subr.mxu0 0.0
    %72 = vmatpush1.msra.mxu0 0.0
    %73 = vmatprep.subr.mxu0 0.0
    %74 = vmatpush1.msra.mxu0 0.0
    %75 = vmatprep.subr.mxu0 0.0
    %76 = vmatpush1.msra.mxu0 0.0
    %77 = vmatprep.subr.mxu0 0.0
    %78 = vmatpush1.msra.mxu0 0.0
    %79 = vmatprep.subr.mxu0 0.0
    %80 = vmatpush1.msra.mxu0 0.0
    %81 = vmatprep.subr.mxu0 0.0
    %82 = vmatpush1.msra.mxu0 0.0
    %83 = vmatprep.subr.mxu0 0.0
    %84 = vmatpush1.msra.mxu0 0.0
    %85 = vmatprep.subr.mxu0 0.0
    %86 = vmatpush1.msra.mxu0 0.0
    %87 = vmatprep.subr.mxu0 0.0
    %88 = vmatpush1.msra.mxu0 0.0
    %89 = vmatprep.subr.mxu0 0.0
    %90 = vmatpush1.msra.mxu0 0.0
    %91 = vmatprep.subr.mxu0 0.0
    %92 = vmatpush1.msra.mxu0 0.0
    %93 = vmatprep.subr.mxu0 0.0
    %94 = vmatpush1.msra.mxu0 0.0
    %95 = vmatprep.subr.mxu0 0.0
    %96 = vmatpush1.msra.mxu0 0.0
    %97 = vmatprep.subr.mxu0 0.0
    %98 = vmatpush1.msra.mxu0 0.0
    %99 = vmatprep.subr.mxu0 0.0
    %100 = vmatpush1.msra.mxu0 0.0
    %101 = vmatprep.subr.mxu0 0.0
    %102 = vmatpush1.msra.mxu0 0.0
    %103 = vmatprep.subr.mxu0 0.0
    %104 = vmatpush1.msra.mxu0 0.0
    %105 = vmatprep.subr.mxu0 0.0
    %106 = vmatpush1.msra.mxu0 0.0
    %107 = vmatprep.subr.mxu0 0.0
    %108 = vmatpush1.msra.mxu0 0.0
    %109 = vmatprep.subr.mxu0 0.0
    %110 = vmatpush1.msra.mxu0 0.0
    %111 = vmatprep.subr.mxu0 0.0
    %112 = vmatpush1.msra.mxu0 0.0
    %113 = vmatprep.subr.mxu0 0.0
    %114 = vmatpush1.msra.mxu0 0.0
    %115 = vmatprep.subr.mxu0 0.0
    %116 = vmatpush1.msra.mxu0 0.0
    %117 = vmatprep.subr.mxu0 0.0
    %118 = vmatpush1.msra.mxu0 0.0
    %119 = vmatprep.mubr.f32.mxu0 0.0
    %120 = vmatmul.mubr.f32.gmra.mrb[0].mxu0 %v50
    %v121 = vpop.f32.mrb[0].mxu0
    %v122 = vadd.f32 0.0, %v121
    %v123 = vpop.f32.mrb[0].mxu0
    %124 = vmatprep.mubr.f32.mxu0 0.0
    %125 = vmatmul.mubr.f32.gmra.mrb[0].mxu0 %v53
    %v126 = vpop.f32.mrb[0].mxu0
    %v127 = vadd.f32 0.0, %v126
    %v128 = vpop.f32.mrb[0].mxu0
    %129 = vdwg.mxu0
    %v130 = vtanh.pop %v122
    %v131 = vtanh.pop %v127
    %v132 = vlaneseq
    %v133 = vshrl.u32 %v132, 7
    %v134 = vadd.s32 %v133, 8
    %s135 = smul.u32 0, 16
    %v136 = vstv %s135
    %v137 = vadd.s32 %v136, %v133
    %v138 = vadd.s32 %v136, %v134
    %v139 = vmul.u32 %v137, 128
    %v140 = vmul.u32 %v138, 128
    %v141 = vadd.s32 %v139, %v31
    %v142 = vadd.s32 %v140, %v31
    %s143 = sld [smem:[#allocation3]]
    %s144 = smul.u32 %s143, 2654435769
    %v145 = vstv %s144
    %v146 = vadd.s32 %v141, %v145
    %v147 = vadd.s32 %v142, %v145
    %v148 = vshrl.u32 %v146, 16
    %v149 = vshrl.u32 %v147, 16
    %v150 = vxor.u32 %v146, %v148
    %v151 = vxor.u32 %v147, %v149
    %v152 = vmul.u32 %v150, 2146121005
    %v153 = vmul.u32 %v151, 2146121005
    %v154 = vshrl.u32 %v152, 15
    %v155 = vshrl.u32 %v153, 15
    %v156 = vxor.u32 %v152, %v154
    %v157 = vxor.u32 %v153, %v155
    %v158 = vmul.u32 %v156, 2221713035
    %v159 = vmul.u32 %v157, 2221713035
    %v160 = vshrl.u32 %v158, 16
    %v161 = vshrl.u32 %v159, 16
    %v162 = vxor.u32 %v158, %v160
    %v163 = vxor.u32 %v159, %v161
    %vm164 = vcmp.lt.u32.totalorder %v162, 2147483648
    %vm165 = vcmp.lt.u32.totalorder %v163, 2147483648
    %v166 = vmul.f32 %v130, 2.0
    %v167 = vmul.f32 %v131, 2.0
    %v168 = vsel %vm164, %v166, 0.0
    %v169 = vsel %vm165, %v167, 0.0
    %170 = vst [vmem:[#allocation7] sm:$0xff] %v168
    %171 = vst [vmem:[#allocation7 + $0x8] sm:$0xff] %v169
    // Predicated region
    $region14: #{tpu_custom_call.1} parent=1 // pred_check
      _
    $region15: #{tpu_custom_call.1} parent=1 // pred_check_branch
      %173 = sbr.rel (0) target = $region17
    $region16: #{tpu_custom_call.1} parent=1 // pred_region
      %s175 = ssub.s32 256, 256
      %176 = vsyncadd [#allocation6], %s175
      %s177 = sshll.u32 [#allocation7], 4
      %s178 = int_to_ptr.vmem [resolvable:$true] %s177
      %183 = dma.vmem_to_hbm [thread:$0]  %s178, 256, %s3, [#allocation6], 128, 128, 8
    $region17: #{tpu_custom_call.1} parent=1 // pred_fallthru
      _
    // Predicated region
    $region18: #{tpu_custom_call.1} parent=1 // pred_check
      _
    $region19: #{tpu_custom_call.1} parent=1 // pred_check_branch
      %185 = sbr.rel (0) target = $region21
    $region20: #{tpu_custom_call.1} parent=1 // pred_region
      %186 = dma.done [#allocation6], 256
    $region21: #{tpu_custom_call.1} parent=1 // pred_fallthru
      _
    %187 = vsyncpa [#allocation5], 1
    %188 = vsyncpa [#allocation6], 1

// kernel: tpu_custom_call.1
$region0: #{tpu_custom_call.1}
  #allocation0 [shape = 'u32[]', space=smem, size = 0x4, offset = 0x4, fixed_abs, tag = 'smem constant byte address 0x4 - core index']
  #allocation1 [shape = 'u32[144,128]{1,0:T(1,128)}', space=vmem, size = 0x12000, scoped, tag = 'internal scratch']
  #allocation2 [shape = 's32[1]{0}', space=sflag, size = 0x4, scoped, tag = 'scoped memory for tpu_custom_call.1']
  #allocation3 [shape = 's32[1]{0:T(128)S(6)}', space=smem, size = 0x200, scoped, tag = 'prefetched SMEM operand 0']
  %s0 = inlined_call_operand.<no memory space> [shape: s32[1], index: 0, kind: input, shape index: {}]
  %s1 = inlined_call_operand.vmem [shape: s32[16,1], index: 1, kind: input, shape index: {}]
  %s2 = inlined_call_operand.hbm [shape: f32[32,128], index: 2, kind: input, shape index: {}]
  %s3 = inlined_call_operand.hbm [shape: f32[16,128], index: 3, kind: output, shape index: {}]
  %s4 = sld [smem:[#allocation0]]
  $region22: #{tpu_custom_call.1} parent=0
    _
  %s6 = ssub.s32 1, %s4
  %s7 = scalar_select 0, %s6, %s4
  %8 = sst [smem:[#allocation3]] %s0
  $region1: #{tpu_custom_call.1} parent=0
    #allocation4 [shape = 'u8[16384]{0}', space=vmem, size = 0x4000, scoped, tag = 'input window, operand 2, single buffered']
    #allocation5 [shape = 's32[1]{0}', space=sflag, size = 0x4, scoped, tag = 'scoped memory for tpu_custom_call.1']
    #allocation6 [shape = 's32[1]{0}', space=sflag, size = 0x4, scoped, tag = 'scoped memory for tpu_custom_call.1']
    #allocation7 [shape = 'u8[8192]{0}', space=vmem, size = 0x2000, scoped, tag = 'output window, operand 0, single buffered']
    %9 = vsyncpa [#allocation5], 0
    %10 = vsyncpa [#allocation6], 0
    // Predicated region
    $region2: #{tpu_custom_call.1} parent=1 // pred_check
      _
    $region3: #{tpu_custom_call.1} parent=1 // pred_check_branch
      %12 = sbr.rel (0) target = $region5
    $region4: #{tpu_custom_call.1} parent=1 // pred_region
      _
    $region5: #{tpu_custom_call.1} parent=1 // pred_fallthru
      _
    // Predicated region
    $region6: #{tpu_custom_call.1} parent=1 // pred_check
      _
    $region7: #{tpu_custom_call.1} parent=1 // pred_check_branch
      %14 = sbr.rel (0) target = $region9
    $region8: #{tpu_custom_call.1} parent=1 // pred_region
      %s16 = ssub.s32 512, 512
      %17 = vsyncadd [#allocation5], %s16
      %s18 = sshll.u32 [#allocation4], 4
      %s19 = int_to_ptr.vmem [resolvable:$true] %s18
      %24 = dma.hbm_to_vmem [thread:$0]  %s2, 512, %s19, [#allocation5], 128, 128, 8
    $region9: #{tpu_custom_call.1} parent=1 // pred_fallthru
      _
    // Predicated region
    $region10: #{tpu_custom_call.1} parent=1 // pred_check
      _
    $region11: #{tpu_custom_call.1} parent=1 // pred_check_branch
      %26 = sbr.rel (0) target = $region13
    $region12: #{tpu_custom_call.1} parent=1 // pred_region
      %27 = dma.done [#allocation5], 512
    $region13: #{tpu_custom_call.1} parent=1 // pred_fallthru
      _
    %v28 = vld [vmem:[%s1] sm:$0xff]
    %v29 = vld [vmem:[%s1 + $0x8] sm:$0xff]
    %v30 = vlaneseq
    %v31 = vand.u32 %v30, 127
    %32 = vset.pattern.permute.xlu0 0
    %33 = vperm.xlu0 %32, %v28
    %v34 = vpop.permute.xlu0 %33
    %35 = vset.pattern.permute.xlu0 0
    %36 = vperm.xlu0 %35, %v29
    %v37 = vpop.permute.xlu0 %36
    %vm38 = vcmp.eq.s32.totalorder %v34, %v31
    %vm39 = vcmp.eq.s32.totalorder %v37, %v31
    %v40 = vsel %vm38, 1, 0
    %v41 = vsel %vm39, 1, 0
    %v42 = vcvt.s32.f32 %v40
    %v43 = vcvt.s32.f32 %v41
    %v44 = vld [vmem:[#allocation4] sm:$0xff]
    %v45 = vld [vmem:[#allocation4 + $0x8] sm:$0xff]
    %v46 = vld [vmem:[#allocation4 + $0x10] sm:$0xff]
    %v47 = vld [vmem:[#allocation4 + $0x18] sm:$0xff]
    %vm48 = vcmask 261120
    %v50 = vsel %vm48, %v42, 0
    %v53 = vsel %vm48, %v43, 0
    %55 = vmatprep.subr.mxu0 0.0
    %56 = vmatpush1.msra.mxu0 %v44
    %57 = vmatprep.subr.mxu0 0.0
    %58 = vmatpush1.msra.mxu0 %v45
    %59 = vmatprep.subr.mxu0 0.0
    %60 = vmatpush1.msra.mxu0 %v46
    %61 = vmatprep.subr.mxu0 0.0
    %62 = vmatpush1.msra.mxu0 %v47
    %63 = vmatprep.subr.mxu0 0.0
    %64 = vmatpush1.msra.mxu0 0.0
    %65 = vmatprep.subr.mxu0 0.0
    %66 = vmatpush1.msra.mxu0 0.0
    %67 = vmatprep.subr.mxu0 0.0
    %68 = vmatpush1.msra.mxu0 0.0
    %69 = vmatprep.subr.mxu0 0.0
    %70 = vmatpush1.msra.mxu0 0.0
    %71 = vmatprep.subr.mxu0 0.0
    %72 = vmatpush1.msra.mxu0 0.0
    %73 = vmatprep.subr.mxu0 0.0
    %74 = vmatpush1.msra.mxu0 0.0
    %75 = vmatprep.subr.mxu0 0.0
    %76 = vmatpush1.msra.mxu0 0.0
    %77 = vmatprep.subr.mxu0 0.0
    %78 = vmatpush1.msra.mxu0 0.0
    %79 = vmatprep.subr.mxu0 0.0
    %80 = vmatpush1.msra.mxu0 0.0
    %81 = vmatprep.subr.mxu0 0.0
    %82 = vmatpush1.msra.mxu0 0.0
    %83 = vmatprep.subr.mxu0 0.0
    %84 = vmatpush1.msra.mxu0 0.0
    %85 = vmatprep.subr.mxu0 0.0
    %86 = vmatpush1.msra.mxu0 0.0
    %87 = vmatprep.subr.mxu0 0.0
    %88 = vmatpush1.msra.mxu0 0.0
    %89 = vmatprep.subr.mxu0 0.0
    %90 = vmatpush1.msra.mxu0 0.0
    %91 = vmatprep.subr.mxu0 0.0
    %92 = vmatpush1.msra.mxu0 0.0
    %93 = vmatprep.subr.mxu0 0.0
    %94 = vmatpush1.msra.mxu0 0.0
    %95 = vmatprep.subr.mxu0 0.0
    %96 = vmatpush1.msra.mxu0 0.0
    %97 = vmatprep.subr.mxu0 0.0
    %98 = vmatpush1.msra.mxu0 0.0
    %99 = vmatprep.subr.mxu0 0.0
    %100 = vmatpush1.msra.mxu0 0.0
    %101 = vmatprep.subr.mxu0 0.0
    %102 = vmatpush1.msra.mxu0 0.0
    %103 = vmatprep.subr.mxu0 0.0
    %104 = vmatpush1.msra.mxu0 0.0
    %105 = vmatprep.subr.mxu0 0.0
    %106 = vmatpush1.msra.mxu0 0.0
    %107 = vmatprep.subr.mxu0 0.0
    %108 = vmatpush1.msra.mxu0 0.0
    %109 = vmatprep.subr.mxu0 0.0
    %110 = vmatpush1.msra.mxu0 0.0
    %111 = vmatprep.subr.mxu0 0.0
    %112 = vmatpush1.msra.mxu0 0.0
    %113 = vmatprep.subr.mxu0 0.0
    %114 = vmatpush1.msra.mxu0 0.0
    %115 = vmatprep.subr.mxu0 0.0
    %116 = vmatpush1.msra.mxu0 0.0
    %117 = vmatprep.subr.mxu0 0.0
    %118 = vmatpush1.msra.mxu0 0.0
    %119 = vmatprep.mubr.f32.mxu0 0.0
    %120 = vmatmul.mubr.f32.gmra.mrb[0].mxu0 %v50
    %v121 = vpop.f32.mrb[0].mxu0
    %v122 = vadd.f32 0.0, %v121
    %v123 = vpop.f32.mrb[0].mxu0
    %124 = vmatprep.mubr.f32.mxu0 0.0
    %125 = vmatmul.mubr.f32.gmra.mrb[0].mxu0 %v53
    %v126 = vpop.f32.mrb[0].mxu0
    %v127 = vadd.f32 0.0, %v126
    %v128 = vpop.f32.mrb[0].mxu0
    %129 = vdwg.mxu0
    %v130 = vtanh.pop %v122
    %v131 = vtanh.pop %v127
    %v132 = vlaneseq
    %v133 = vshrl.u32 %v132, 7
    %v134 = vadd.s32 %v133, 8
    %s135 = smul.u32 0, 16
    %v136 = vstv %s135
    %v137 = vadd.s32 %v136, %v133
    %v138 = vadd.s32 %v136, %v134
    %v139 = vmul.u32 %v137, 128
    %v140 = vmul.u32 %v138, 128
    %v141 = vadd.s32 %v139, %v31
    %v142 = vadd.s32 %v140, %v31
    %s143 = sld [smem:[#allocation3]]
    %s144 = smul.u32 %s143, 2654435769
    %v145 = vstv %s144
    %v146 = vadd.s32 %v141, %v145
    %v147 = vadd.s32 %v142, %v145
    %v148 = vshrl.u32 %v146, 16
    %v149 = vshrl.u32 %v147, 16
    %v150 = vxor.u32 %v146, %v148
    %v151 = vxor.u32 %v147, %v149
    %v152 = vmul.u32 %v150, 2146121005
    %v153 = vmul.u32 %v151, 2146121005
    %v154 = vshrl.u32 %v152, 15
    %v155 = vshrl.u32 %v153, 15
    %v156 = vxor.u32 %v152, %v154
    %v157 = vxor.u32 %v153, %v155
    %v158 = vmul.u32 %v156, 2221713035
    %v159 = vmul.u32 %v157, 2221713035
    %v160 = vshrl.u32 %v158, 16
    %v161 = vshrl.u32 %v159, 16
    %v162 = vxor.u32 %v158, %v160
    %v163 = vxor.u32 %v159, %v161
    %vm164 = vcmp.lt.u32.totalorder %v162, 2147483648
    %vm165 = vcmp.lt.u32.totalorder %v163, 2147483648
    %v166 = vmul.f32 %v130, 2.0
    %v167 = vmul.f32 %v131, 2.0
    %v168 = vsel %vm164, %v166, 0.0
    %v169 = vsel %vm165, %v167, 0.0
    %170 = vst [vmem:[#allocation7] sm:$0xff] %v168
    %171 = vst [vmem:[#allocation7 + $0x8] sm:$0xff] %v169
    // Predicated region
    $region14: #{tpu_custom_call.1} parent=1 // pred_check
      _
    $region15: #{tpu_custom_call.1} parent=1 // pred_check_branch
      %173 = sbr.rel (0) target = $region17
    $region16: #{tpu_custom_call.1} parent=1 // pred_region
      %s175 = ssub.s32 256, 256
      %176 = vsyncadd [#allocation6], %s175
      %s177 = sshll.u32 [#allocation7], 4
      %s178 = int_to_ptr.vmem [resolvable:$true] %s177
      %183 = dma.vmem_to_hbm [thread:$0]  %s178, 256, %s3, [#allocation6], 128, 128, 8
    $region17: #{tpu_custom_call.1} parent=1 // pred_fallthru
      _
    // Predicated region
    $region18: #{tpu_custom_call.1} parent=1 // pred_check
      _
    $region19: #{tpu_custom_call.1} parent=1 // pred_check_branch
      %185 = sbr.rel (0) target = $region21
    $region20: #{tpu_custom_call.1} parent=1 // pred_region
      %186 = dma.done [#allocation6], 256
    $region21: #{tpu_custom_call.1} parent=1 // pred_fallthru
      _
    %187 = vsyncpa [#allocation5], 1
    %188 = vsyncpa [#allocation6], 1

</llo_original>
